<compile_context>
chip_gen: v7x
topology: tpu7x:2x2x1
jax: 0.10.0
libtpu: 0.0.40
codegen_flags: <defaults>
</compile_context>

<pallas_src>
import jax
import jax.numpy as jnp
from jax.experimental import pallas as pl
from jax.experimental.pallas import tpu as pltpu


_PAD_LOGIT = -1e9  # softplus(-pad) + (1 - 0) * pad == 0 exactly in f32


def _round_up(a, b):
    return ((a + b - 1) // b) * b


def _cdiv(a, b):
    return -(-a // b)


def _default_num_slices():
    """2 slices on chips with 2 TensorCores per chip (v7x, v4 megacore), else 1."""
    try:
        kind = jax.devices()[0].device_kind.lower()
    except Exception:
        return 1
    return 2 if ("v7" in kind or "v4" in kind) else 1


def _make_wbce_kernel(lane):
    def kernel(x_ref, y_ref, out_ref, loss_acc, pos_acc, neg_acc):
        """Per-tile partial sums for WeightedBCE.

        x_ref : (block_rows, lane) logits tile (native dtype, cast here)
        y_ref : (block_rows, lane) {0,1} labels tile (bf16 in HBM)
        out_ref : (1, 8, 3*lane) packed per-slice partials, written once per
                  slice: lanes [0,lane)=loss sum, [lane,2lane)=pos count,
                  [2lane,3lane)=neg count.
        *_acc : (8, lane) f32 VMEM scratch accumulators, resident across the
                inner grid axis.
        """
        b = pl.program_id(1)

        x = x_ref[...].astype(jnp.float32)
        y = y_ref[...].astype(jnp.float32)

        # Numerically stable softplus(-x); exp / log1p run on the EUP.
        sp_negx = jnp.maximum(-x, 0.0) + jnp.log1p(jnp.exp(-jnp.abs(x)))
        # Unweighted BCE-with-logits: y*sp(-x) + (1-y)*sp(x) == sp(-x) + (1-y)*x
        per_elem = sp_negx + (1.0 - y) * x
        is_pos = (y == 1.0).astype(jnp.float32)
        is_neg = (y == 0.0).astype(jnp.float32)

        # Layout-preserving fold (block_rows, lane) -> (8, lane): split rows by
        # sublane group and sum over the groups.  Pure element-wise VPU adds,
        # no XLU work and no masked stores in the streaming loop.
        g = x.shape[0] // 8

        def fold(a):
            return jnp.sum(a.reshape(g, 8, lane), axis=0)

        @pl.when(b == 0)
        def _init():
            loss_acc[...] = jnp.zeros_like(loss_acc)
            pos_acc[...] = jnp.zeros_like(pos_acc)
            neg_acc[...] = jnp.zeros_like(neg_acc)

        loss_acc[...] += fold(per_elem)
        pos_acc[...] += fold(is_pos)
        neg_acc[...] += fold(is_neg)

        # Single lane-dense (multiple-of-128) store per slice.
        @pl.when(b == pl.num_programs(1) - 1)
        def _finalize():
            out_ref[0, :, 0 * lane:1 * lane] = loss_acc[...]
            out_ref[0, :, 1 * lane:2 * lane] = pos_acc[...]
            out_ref[0, :, 2 * lane:3 * lane] = neg_acc[...]

    return kernel


def weighted_bce(inputs, targets, *, lane=512, max_block_rows=2048, num_slices=None):
    """inputs: (N,) float logits; targets: (N,) {0,1} labels -> scalar f32 loss."""
    n = int(inputs.shape[0])
    assert targets.shape == inputs.shape
    assert lane % 128 == 0

    # bf16 targets pack 16 rows per sublane tile -> keep row counts /16.
    max_block_rows = max(16, _round_up(max_block_rows, 16))

    # ---- sizing: sublane-dense (rows, lane) slab, row-tiled, sliced per TC ----
    rows_needed = max(_cdiv(n, lane), 1)
    block_rows = min(max_block_rows, _round_up(rows_needed, 16))
    total_blocks = _cdiv(rows_needed, block_rows)
    if num_slices is None:
        num_slices = _default_num_slices()
    num_slices = max(1, min(num_slices, total_blocks))
    blocks_per_slice = _cdiv(total_blocks, num_slices)
    # Rebalance block_rows so all (num_slices * blocks_per_slice) blocks cover
    # rows_needed with minimal padding: both TensorCores get equal block counts
    # and no whole padded block is DMA'd for nothing.
    block_rows = _round_up(_cdiv(rows_needed, num_slices * blocks_per_slice), 16)
    rows = num_slices * blocks_per_slice * block_rows
    n_pad = rows * lane - n

    # Logits stay in their native dtype; targets are streamed as bf16 (0.0/1.0
    # are exact in bf16, matching the module's hard-label counting semantics),
    # cutting HBM traffic by ~25%.  Cast to f32 happens inside the kernel.
    x = inputs
    y = targets.astype(jnp.bfloat16)
    if n_pad:
        # Pad logits so softplus(-x) + (1 - y) * x == 0 exactly; pad targets
        # with 0 (the pad count is removed from the neg count below).
        x = jnp.concatenate([x, jnp.full((n_pad,), _PAD_LOGIT, dtype=x.dtype)])
        y = jnp.concatenate([y, jnp.zeros((n_pad,), dtype=y.dtype)])
    x2 = x.reshape(rows, lane)
    y2 = y.reshape(rows, lane)

    blk = (block_rows, lane)
    in_map = lambda s, b: (s * blocks_per_slice + b, 0)
    out_map = lambda s, b: (s, 0, 0)

    part = pl.pallas_call(
        _make_wbce_kernel(lane),
        grid=(num_slices, blocks_per_slice),
        in_specs=[pl.BlockSpec(blk, in_map), pl.BlockSpec(blk, in_map)],
        out_specs=pl.BlockSpec((1, 8, 3 * lane), out_map),
        out_shape=jax.ShapeDtypeStruct((num_slices, 8, 3 * lane), jnp.float32),
        scratch_shapes=[pltpu.VMEM((8, lane), jnp.float32)] * 3,
        compiler_params=pltpu.CompilerParams(
            # Leading axis shards across TensorCores on multi-TC chips; if
            # profiling shows one v7x core idle, switch it to
            # pltpu.CORE_PARALLEL.  Inner axis carries resident accumulators.
            dimension_semantics=("parallel", "arbitrary"),
            vmem_limit_bytes=32 * 1024 * 1024,
        ),
    )(x2, y2)

    # Tiny scalar epilogue: final lane+sublane reductions, apply the index-1
    # pos_weight correction exactly once, divide by the *global* N.
    loss_sum = jnp.sum(part[:, :, 0 * lane:1 * lane])
    pos = jnp.sum(part[:, :, 1 * lane:2 * lane])
    neg = jnp.sum(part[:, :, 2 * lane:3 * lane]) - jnp.float32(n_pad)

    if n >= 2:
        x1 = inputs[1].astype(jnp.float32)
        y1 = targets[1].astype(jnp.float32)
        c0 = y1 * (jnp.maximum(-x1, 0.0) + jnp.log1p(jnp.exp(-jnp.abs(x1))))
    else:
        # TODO(synk): for n < 2 PyTorch would index-error on weights[1]; here the
        # correction is simply 0.
        c0 = jnp.float32(0.0)

    pos_weight = jnp.where(pos == 0.0, jnp.float32(1.0), neg / jnp.maximum(pos, 1.0))
    return (loss_sum + (pos_weight - 1.0) * c0) / jnp.float32(n)


def _reference(inputs, targets):
    # Pure-JAX mirror of the PyTorch module (weights[i]=pos_weight only at i==1).
    x = inputs.astype(jnp.float32)
    y = targets.astype(jnp.float32)
    pos = jnp.sum((y == 1.0).astype(jnp.float32))
    neg = jnp.sum((y == 0.0).astype(jnp.float32))
    pw = jnp.where(pos == 0.0, 1.0, neg / jnp.maximum(pos, 1.0))
    w = jnp.ones_like(x).at[1].set(pw)
    sp = jnp.maximum(-x, 0.0) + jnp.log1p(jnp.exp(-jnp.abs(x)))
    per = (1.0 + (w - 1.0) * y) * sp + (1.0 - y) * x
    return jnp.mean(per)


if __name__ == "__main__":
    key = jax.random.PRNGKey(0)

    def _check(n, targets_all_zero=False, **kw):
        global key
        k1, k2, key = jax.random.split(key, 3)
        logits = jax.random.normal(k1, (n,), dtype=jnp.float32)
        if targets_all_zero:
            tgts = jnp.zeros((n,), dtype=jnp.float32)
        else:
            tgts = jax.random.bernoulli(k2, p=0.3, shape=(n,)).astype(jnp.float32)
        got = jax.block_until_ready(weighted_bce(logits, tgts, **kw))
        ref = jax.block_until_ready(_reference(logits, tgts))
        assert jnp.allclose(got, ref, rtol=1e-4, atol=1e-5), (n, kw, got, ref)

    _check(4096)                                      # aligned, single tile
    _check(1000)                                      # padding path
    _check(5)                                         # tiny N, heavy padding, index-1 quirk
    _check(64, targets_all_zero=True)                 # pos_num == 0 branch
    _check(20_000, max_block_rows=16)                 # multi-block accumulation path
    _check(20_000, max_block_rows=16, num_slices=2)   # 2-slice (2-TensorCore) path

    print("KERNEL_OK")
</pallas_src>

<mosaic_0001>
module attributes {stable_mosaic.version = 11 : i64} {
  func.func @kernel(%arg0: i32, %arg1: i32, %arg2: memref<16x512xf32, #tpu.memory_space<vmem>>, %arg3: memref<16x512xbf16, #tpu.memory_space<vmem>>, %arg4: memref<1x8x1536xf32, #tpu.memory_space<vmem>>, %arg5: memref<8x512xf32, #tpu.memory_space<vmem>>, %arg6: memref<8x512xf32, #tpu.memory_space<vmem>>, %arg7: memref<8x512xf32, #tpu.memory_space<vmem>>) attributes {dimension_semantics = [#tpu.dimension_semantics<parallel>, #tpu.dimension_semantics<arbitrary>], iteration_bounds = array<i64: 1, 1>, scalar_prefetch = 0 : i64, scratch_operands = 3 : i64, tpu.core_type = #tpu.core_type<tc>, window_params = [{transform_indices = @transform_0, window_bounds = array<i64: 16, 512>}, {transform_indices = @transform_1, window_bounds = array<i64: 16, 512>}, {transform_indices = @transform_2, window_bounds = array<i64: 1, 8, 1536>}]} {
    %c0 = arith.constant 0 : index
    %c0_0 = arith.constant 0 : index
    %0 = vector.load %arg2[%c0, %c0_0] : memref<16x512xf32, #tpu.memory_space<vmem>>, vector<16x512xf32>
    %c0_1 = arith.constant 0 : index
    %c0_2 = arith.constant 0 : index
    %1 = vector.load %arg3[%c0_1, %c0_2] : memref<16x512xbf16, #tpu.memory_space<vmem>>, vector<16x512xbf16>
    %2 = arith.extf %1 : vector<16x512xbf16> to vector<16x512xf32>
    %cst = arith.constant 0.000000e+00 : f32
    %3 = vector.broadcast %cst : f32 to vector<16x512xf32>
    %4 = arith.subf %3, %0 : vector<16x512xf32>
    %cst_3 = arith.constant 0.000000e+00 : f32
    %5 = vector.broadcast %cst_3 : f32 to vector<16x512xf32>
    %6 = arith.maximumf %4, %5 : vector<16x512xf32>
    %7 = math.absf %0 : vector<16x512xf32>
    %cst_4 = arith.constant 0.000000e+00 : f32
    %8 = vector.broadcast %cst_4 : f32 to vector<16x512xf32>
    %9 = arith.subf %8, %7 : vector<16x512xf32>
    %10 = math.exp %9 : vector<16x512xf32>
    %11 = math.log1p %10 : vector<16x512xf32>
    %12 = arith.addf %6, %11 : vector<16x512xf32>
    %cst_5 = arith.constant 1.000000e+00 : f32
    %13 = vector.broadcast %cst_5 : f32 to vector<16x512xf32>
    %14 = arith.subf %13, %2 : vector<16x512xf32>
    %15 = arith.mulf %14, %0 : vector<16x512xf32>
    %16 = arith.addf %12, %15 : vector<16x512xf32>
    %cst_6 = arith.constant 1.000000e+00 : f32
    %17 = vector.broadcast %cst_6 : f32 to vector<16x512xf32>
    %18 = arith.cmpf oeq, %2, %17 : vector<16x512xf32>
    %19 = arith.extui %18 : vector<16x512xi1> to vector<16x512xi32>
    %20 = arith.sitofp %19 : vector<16x512xi32> to vector<16x512xf32>
    %cst_7 = arith.constant 0.000000e+00 : f32
    %21 = vector.broadcast %cst_7 : f32 to vector<16x512xf32>
    %22 = arith.cmpf oeq, %2, %21 : vector<16x512xf32>
    %23 = arith.extui %22 : vector<16x512xi1> to vector<16x512xi32>
    %24 = arith.sitofp %23 : vector<16x512xi32> to vector<16x512xf32>
    %c0_i32 = arith.constant 0 : i32
    %25 = arith.cmpi eq, %arg1, %c0_i32 : i32
    %26 = arith.extui %25 : i1 to i32
    %c0_i32_8 = arith.constant 0 : i32
    %27 = arith.cmpi ne, %26, %c0_i32_8 : i32
    scf.if %27 {
      %cst_26 = arith.constant 0.000000e+00 : f32
      %46 = vector.broadcast %cst_26 : f32 to vector<8x512xf32>
      %c0_27 = arith.constant 0 : index
      %c0_28 = arith.constant 0 : index
      %47 = vector.load %arg5[%c0_27, %c0_28] : memref<8x512xf32, #tpu.memory_space<vmem>>, vector<8x512xf32>
      tpu.vector_store %arg5[%c0_27, %c0_28], %46 {strides = array<i32>} : memref<8x512xf32, #tpu.memory_space<vmem>>, vector<8x512xf32>,
      %cst_29 = arith.constant 0.000000e+00 : f32
      %48 = vector.broadcast %cst_29 : f32 to vector<8x512xf32>
      %c0_30 = arith.constant 0 : index
      %c0_31 = arith.constant 0 : index
      %49 = vector.load %arg6[%c0_30, %c0_31] : memref<8x512xf32, #tpu.memory_space<vmem>>, vector<8x512xf32>
      tpu.vector_store %arg6[%c0_30, %c0_31], %48 {strides = array<i32>} : memref<8x512xf32, #tpu.memory_space<vmem>>, vector<8x512xf32>,
      %cst_32 = arith.constant 0.000000e+00 : f32
      %50 = vector.broadcast %cst_32 : f32 to vector<8x512xf32>
      %c0_33 = arith.constant 0 : index
      %c0_34 = arith.constant 0 : index
      %51 = vector.load %arg7[%c0_33, %c0_34] : memref<8x512xf32, #tpu.memory_space<vmem>>, vector<8x512xf32>
      tpu.vector_store %arg7[%c0_33, %c0_34], %50 {strides = array<i32>} : memref<8x512xf32, #tpu.memory_space<vmem>>, vector<8x512xf32>,
    } else {
    }
    %c0_9 = arith.constant 0 : index
    %c0_10 = arith.constant 0 : index
    %28 = vector.load %arg5[%c0_9, %c0_10] : memref<8x512xf32, #tpu.memory_space<vmem>>, vector<8x512xf32>
    %29 = vector.shape_cast %16 : vector<16x512xf32> to vector<2x8x512xf32>
    %cst_11 = arith.constant dense<0.000000e+00> : vector<8x512xf32>
    %30 = vector.multi_reduction <add>, %29, %cst_11 [0] : vector<2x8x512xf32> to vector<8x512xf32>
    %31 = arith.addf %28, %30 : vector<8x512xf32>
    %c0_12 = arith.constant 0 : index
    %c0_13 = arith.constant 0 : index
    %32 = vector.load %arg5[%c0_12, %c0_13] : memref<8x512xf32, #tpu.memory_space<vmem>>, vector<8x512xf32>
    tpu.vector_store %arg5[%c0_12, %c0_13], %31 {strides = array<i32>} : memref<8x512xf32, #tpu.memory_space<vmem>>, vector<8x512xf32>,
    %c0_14 = arith.constant 0 : index
    %c0_15 = arith.constant 0 : index
    %33 = vector.load %arg6[%c0_14, %c0_15] : memref<8x512xf32, #tpu.memory_space<vmem>>, vector<8x512xf32>
    %34 = vector.shape_cast %20 : vector<16x512xf32> to vector<2x8x512xf32>
    %cst_16 = arith.constant dense<0.000000e+00> : vector<8x512xf32>
    %35 = vector.multi_reduction <add>, %34, %cst_16 [0] : vector<2x8x512xf32> to vector<8x512xf32>
    %36 = arith.addf %33, %35 : vector<8x512xf32>
    %c0_17 = arith.constant 0 : index
    %c0_18 = arith.constant 0 : index
    %37 = vector.load %arg6[%c0_17, %c0_18] : memref<8x512xf32, #tpu.memory_space<vmem>>, vector<8x512xf32>
    tpu.vector_store %arg6[%c0_17, %c0_18], %36 {strides = array<i32>} : memref<8x512xf32, #tpu.memory_space<vmem>>, vector<8x512xf32>,
    %c0_19 = arith.constant 0 : index
    %c0_20 = arith.constant 0 : index
    %38 = vector.load %arg7[%c0_19, %c0_20] : memref<8x512xf32, #tpu.memory_space<vmem>>, vector<8x512xf32>
    %39 = vector.shape_cast %24 : vector<16x512xf32> to vector<2x8x512xf32>
    %cst_21 = arith.constant dense<0.000000e+00> : vector<8x512xf32>
    %40 = vector.multi_reduction <add>, %39, %cst_21 [0] : vector<2x8x512xf32> to vector<8x512xf32>
    %41 = arith.addf %38, %40 : vector<8x512xf32>
    %c0_22 = arith.constant 0 : index
    %c0_23 = arith.constant 0 : index
    %42 = vector.load %arg7[%c0_22, %c0_23] : memref<8x512xf32, #tpu.memory_space<vmem>>, vector<8x512xf32>
    tpu.vector_store %arg7[%c0_22, %c0_23], %41 {strides = array<i32>} : memref<8x512xf32, #tpu.memory_space<vmem>>, vector<8x512xf32>,
    %c0_i32_24 = arith.constant 0 : i32
    %43 = arith.cmpi eq, %arg1, %c0_i32_24 : i32
    %44 = arith.extui %43 : i1 to i32
    %c0_i32_25 = arith.constant 0 : i32
    %45 = arith.cmpi ne, %44, %c0_i32_25 : i32
    scf.if %45 {
      %c0_26 = arith.constant 0 : index
      %c0_27 = arith.constant 0 : index
      %46 = vector.load %arg5[%c0_26, %c0_27] : memref<8x512xf32, #tpu.memory_space<vmem>>, vector<8x512xf32>
      %c0_28 = arith.constant 0 : index
      %c0_29 = arith.constant 0 : index
      %c0_30 = arith.constant 0 : index
      %47 = vector.load %arg4[%c0_28, %c0_29, %c0_30] : memref<1x8x1536xf32, #tpu.memory_space<vmem>>, vector<1x8x512xf32>
      %48 = vector.shape_cast %47 : vector<1x8x512xf32> to vector<8x512xf32>
      %49 = vector.shape_cast %46 : vector<8x512xf32> to vector<1x8x512xf32>
      tpu.vector_store %arg4[%c0_28, %c0_29, %c0_30], %49 {strides = array<i32>} : memref<1x8x1536xf32, #tpu.memory_space<vmem>>, vector<1x8x512xf32>,
      %c0_31 = arith.constant 0 : index
      %c0_32 = arith.constant 0 : index
      %50 = vector.load %arg6[%c0_31, %c0_32] : memref<8x512xf32, #tpu.memory_space<vmem>>, vector<8x512xf32>
      %c0_33 = arith.constant 0 : index
      %c0_34 = arith.constant 0 : index
      %c512 = arith.constant 512 : index
      %51 = vector.load %arg4[%c0_33, %c0_34, %c512] : memref<1x8x1536xf32, #tpu.memory_space<vmem>>, vector<1x8x512xf32>
      %52 = vector.shape_cast %51 : vector<1x8x512xf32> to vector<8x512xf32>
      %53 = vector.shape_cast %50 : vector<8x512xf32> to vector<1x8x512xf32>
      tpu.vector_store %arg4[%c0_33, %c0_34, %c512], %53 {strides = array<i32>} : memref<1x8x1536xf32, #tpu.memory_space<vmem>>, vector<1x8x512xf32>,
      %c0_35 = arith.constant 0 : index
      %c0_36 = arith.constant 0 : index
      %54 = vector.load %arg7[%c0_35, %c0_36] : memref<8x512xf32, #tpu.memory_space<vmem>>, vector<8x512xf32>
      %c0_37 = arith.constant 0 : index
      %c0_38 = arith.constant 0 : index
      %c1024 = arith.constant 1024 : index
      %55 = vector.load %arg4[%c0_37, %c0_38, %c1024] : memref<1x8x1536xf32, #tpu.memory_space<vmem>>, vector<1x8x512xf32>
      %56 = vector.shape_cast %55 : vector<1x8x512xf32> to vector<8x512xf32>
      %57 = vector.shape_cast %54 : vector<8x512xf32> to vector<1x8x512xf32>
      tpu.vector_store %arg4[%c0_37, %c0_38, %c1024], %57 {strides = array<i32>} : memref<1x8x1536xf32, #tpu.memory_space<vmem>>, vector<1x8x512xf32>,
    } else {
    }
    return
  }
  func.func @transform_0(%arg0: i32, %arg1: i32) -> (i32, i32) {
    %c1_i32 = arith.constant 1 : i32
    %0 = arith.muli %arg0, %c1_i32 : i32
    %1 = arith.addi %0, %arg1 : i32
    %c0_i32 = arith.constant 0 : i32
    %c0_i32_0 = arith.constant 0 : i32
    return %1, %c0_i32 : i32, i32
  }
  func.func @transform_1(%arg0: i32, %arg1: i32) -> (i32, i32) {
    %c1_i32 = arith.constant 1 : i32
    %0 = arith.muli %arg0, %c1_i32 : i32
    %1 = arith.addi %0, %arg1 : i32
    %c0_i32 = arith.constant 0 : i32
    %c0_i32_0 = arith.constant 0 : i32
    return %1, %c0_i32 : i32, i32
  }
  func.func @transform_2(%arg0: i32, %arg1: i32) -> (i32, i32, i32) {
    %c0_i32 = arith.constant 0 : i32
    %c0_i32_0 = arith.constant 0 : i32
    %c0_i32_1 = arith.constant 0 : i32
    return %arg0, %c0_i32, %c0_i32_0 : i32, i32, i32
  }
}

</mosaic_0001>

<llo_original>
// kernel: tpu_custom_call.1
$region0: #{tpu_custom_call.1}
  #allocation0 [shape = 'u32[]', space=smem, size = 0x4, offset = 0x4, fixed_abs, tag = 'smem constant byte address 0x4 - core index']
  #allocation1 [shape = 'u32[144,128]{1,0:T(1,128)}', space=vmem, size = 0x12000, scoped, tag = 'internal scratch']
  #allocation2 [shape = 'f32[8,512]{1,0:T(8,128)}', space=vmem, size = 0x4000, scoped, tag = 'scratch operand']
  #allocation3 [shape = 'f32[8,512]{1,0:T(8,128)}', space=vmem, size = 0x4000, scoped, tag = 'scratch operand']
  #allocation4 [shape = 'f32[8,512]{1,0:T(8,128)}', space=vmem, size = 0x4000, scoped, tag = 'scratch operand']
  %s0 = inlined_call_operand.hbm [shape: f32[16,512], index: 0, kind: input, shape index: {}]
  %s1 = inlined_call_operand.hbm [shape: bf16[16,512], index: 1, kind: input, shape index: {}]
  %s2 = inlined_call_operand.hbm [shape: f32[1,8,1536], index: 2, kind: output, shape index: {}]
  %s3 = sld [smem:[#allocation0]]
  $region34: #{tpu_custom_call.1} parent=0
    _
  %s5 = ssub.s32 1, %s3
  %s6 = scalar_select 0, %s5, %s3
  $region1: #{tpu_custom_call.1} parent=0
    #allocation5 [shape = 'u8[32768]{0}', space=vmem, size = 0x8000, scoped, tag = 'input window, operand 0, single buffered']
    #allocation6 [shape = 's32[1]{0}', space=sflag, size = 0x4, scoped, tag = 'scoped memory for tpu_custom_call.1']
    #allocation7 [shape = 's32[1]{0}', space=sflag, size = 0x4, scoped, tag = 'scoped memory for tpu_custom_call.1']
    #allocation8 [shape = 'u8[16384]{0}', space=vmem, size = 0x4000, scoped, tag = 'input window, operand 1, single buffered']
    #allocation9 [shape = 's32[1]{0}', space=sflag, size = 0x4, scoped, tag = 'scoped memory for tpu_custom_call.1']
    #allocation10 [shape = 'u8[49152]{0}', space=vmem, size = 0xc000, scoped, tag = 'output window, operand 0, single buffered']
    %7 = vsyncpa [#allocation6], 0
    %8 = vsyncpa [#allocation9], 0
    %9 = vsyncpa [#allocation7], 0
    // Predicated region
    $region2: #{tpu_custom_call.1} parent=1 // pred_check
      _
    $region3: #{tpu_custom_call.1} parent=1 // pred_check_branch
      %11 = sbr.rel (0) target = $region5
    $region4: #{tpu_custom_call.1} parent=1 // pred_region
      %s12 = sadd.s32 0, 0
      %s13 = smul.u32 2, %s12
      %s15 = ssub.s32 1024, 1024
      %16 = vsyncadd [#allocation6], %s15
      %s17 = smul.addr %s13, 4
      %s18 = smul.addr %s17, 128
      %s19 = scalar_lea.hbm %s0, %s18
      %s20 = sshll.u32 [#allocation5], 4
      %s21 = int_to_ptr.vmem [resolvable:$true] %s20
      %26 = dma.hbm_to_vmem [thread:$0]  %s19, 1024, %s21, [#allocation6], 512, 512, 32
    $region5: #{tpu_custom_call.1} parent=1 // pred_fallthru
      _
    // Predicated region
    $region6: #{tpu_custom_call.1} parent=1 // pred_check
      _
    $region7: #{tpu_custom_call.1} parent=1 // pred_check_branch
      %28 = sbr.rel (0) target = $region9
    $region8: #{tpu_custom_call.1} parent=1 // pred_region
      %s29 = sadd.s32 0, 0
      %s30 = smul.u32 2, %s29
      %s32 = ssub.s32 512, 512
      %33 = vsyncadd [#allocation9], %s32
      %s34 = smul.addr %s30, 4
      %s35 = smul.addr %s34, 64
      %s36 = scalar_lea.hbm %s1, %s35
      %s37 = sshll.u32 [#allocation8], 4
      %s38 = int_to_ptr.vmem [resolvable:$true] %s37
      %43 = dma.hbm_to_vmem [thread:$0]  %s36, 512, %s38, [#allocation9], 256, 256, 16
    $region9: #{tpu_custom_call.1} parent=1 // pred_fallthru
      _
    // Predicated region
    $region10: #{tpu_custom_call.1} parent=1 // pred_check
      _
    $region11: #{tpu_custom_call.1} parent=1 // pred_check_branch
      %45 = sbr.rel (0) target = $region13
    $region12: #{tpu_custom_call.1} parent=1 // pred_region
      %46 = dma.done [#allocation6], 1024
    $region13: #{tpu_custom_call.1} parent=1 // pred_fallthru
      _
    // Predicated region
    $region14: #{tpu_custom_call.1} parent=1 // pred_check
      _
    $region15: #{tpu_custom_call.1} parent=1 // pred_check_branch
      %48 = sbr.rel (0) target = $region17
    $region16: #{tpu_custom_call.1} parent=1 // pred_region
      %49 = dma.done [#allocation9], 512
    $region17: #{tpu_custom_call.1} parent=1 // pred_fallthru
      _
    %s50 = sadd.s32 0, 0
    %s51 = smul.u32 2, %s50
    %s52 = sadd.s32 0, 0
    %s53 = smul.u32 2, %s52
    %v54 = vld [vmem:[#allocation5] sm:$0xff]
    %v55 = vld [vmem:[#allocation5 + $0x8] sm:$0xff]
    %v56 = vld [vmem:[#allocation5 + $0x10] sm:$0xff]
    %v57 = vld [vmem:[#allocation5 + $0x18] sm:$0xff]
    %v58 = vld [vmem:[#allocation5 + $0x20] sm:$0xff]
    %v59 = vld [vmem:[#allocation5 + $0x28] sm:$0xff]
    %v60 = vld [vmem:[#allocation5 + $0x30] sm:$0xff]
    %v61 = vld [vmem:[#allocation5 + $0x38] sm:$0xff]
    %v62 = vld [vmem:[#allocation8] sm:$0xff]
    %v63 = vld [vmem:[#allocation8 + $0x8] sm:$0xff]
    %v64 = vld [vmem:[#allocation8 + $0x10] sm:$0xff]
    %v65 = vld [vmem:[#allocation8 + $0x18] sm:$0xff]
    %v66 = vunpack.c.l.bf16 %v62
    %v67 = vunpack.c.h.bf16 %v62
    %v68 = vunpack.c.l.bf16 %v63
    %v69 = vunpack.c.h.bf16 %v63
    %v70 = vunpack.c.l.bf16 %v64
    %v71 = vunpack.c.h.bf16 %v64
    %v72 = vunpack.c.l.bf16 %v65
    %v73 = vunpack.c.h.bf16 %v65
    %v74 = vsub.f32 0.0, %v54
    %v75 = vsub.f32 0.0, %v55
    %v76 = vsub.f32 0.0, %v56
    %v77 = vsub.f32 0.0, %v57
    %v78 = vsub.f32 0.0, %v58
    %v79 = vsub.f32 0.0, %v59
    %v80 = vsub.f32 0.0, %v60
    %v81 = vsub.f32 0.0, %v61
    %v82 = vmax.f32 %v74, 0.0
    %v83 = vmax.f32 %v75, 0.0
    %v84 = vmax.f32 %v76, 0.0
    %v85 = vmax.f32 %v77, 0.0
    %v86 = vmax.f32 %v78, 0.0
    %v87 = vmax.f32 %v79, 0.0
    %v88 = vmax.f32 %v80, 0.0
    %v89 = vmax.f32 %v81, 0.0
    %v90 = vand.u32 2147483647, %v54
    %v91 = vand.u32 2147483647, %v55
    %v92 = vand.u32 2147483647, %v56
    %v93 = vand.u32 2147483647, %v57
    %v94 = vand.u32 2147483647, %v58
    %v95 = vand.u32 2147483647, %v59
    %v96 = vand.u32 2147483647, %v60
    %v97 = vand.u32 2147483647, %v61
    %v98 = vsub.f32 0.0, %v90
    %v99 = vsub.f32 0.0, %v91
    %v100 = vsub.f32 0.0, %v92
    %v101 = vsub.f32 0.0, %v93
    %v102 = vsub.f32 0.0, %v94
    %v103 = vsub.f32 0.0, %v95
    %v104 = vsub.f32 0.0, %v96
    %v105 = vsub.f32 0.0, %v97
    %v106 = vmul.f32 %v98, 1.442695
    %v107 = vpow.pop %v106
    %v108 = vmul.f32 %v99, 1.442695
    %v109 = vpow.pop %v108
    %v110 = vmul.f32 %v100, 1.442695
    %v111 = vpow.pop %v110
    %v112 = vmul.f32 %v101, 1.442695
    %v113 = vpow.pop %v112
    %v114 = vmul.f32 %v102, 1.442695
    %v115 = vpow.pop %v114
    %v116 = vmul.f32 %v103, 1.442695
    %v117 = vpow.pop %v116
    %v118 = vmul.f32 %v104, 1.442695
    %v119 = vpow.pop %v118
    %v120 = vmul.f32 %v105, 1.442695
    %v121 = vpow.pop %v120
    %v122 = vadd.f32 %v107, 1.0
    %v123 = vlog2.pop %v122
    %v124 = vmul.f32 %v123, 0.6931472
    %v125 = vmul.f32 -0.5, %v107
    %v126 = vadd.f32 %v125, 1.0
    %v127 = vmul.f32 %v126, %v107
    %v128 = vand.u32 2147483647, %v107
    %vm129 = vcmp.lt.f32.partialorder %v128, 0.0004427343
    %v130 = vsel %vm129, %v127, %v124
    %v131 = vadd.f32 %v109, 1.0
    %v132 = vlog2.pop %v131
    %v133 = vmul.f32 %v132, 0.6931472
    %v134 = vmul.f32 -0.5, %v109
    %v135 = vadd.f32 %v134, 1.0
    %v136 = vmul.f32 %v135, %v109
    %v137 = vand.u32 2147483647, %v109
    %vm138 = vcmp.lt.f32.partialorder %v137, 0.0004427343
    %v139 = vsel %vm138, %v136, %v133
    %v140 = vadd.f32 %v111, 1.0
    %v141 = vlog2.pop %v140
    %v142 = vmul.f32 %v141, 0.6931472
    %v143 = vmul.f32 -0.5, %v111
    %v144 = vadd.f32 %v143, 1.0
    %v145 = vmul.f32 %v144, %v111
    %v146 = vand.u32 2147483647, %v111
    %vm147 = vcmp.lt.f32.partialorder %v146, 0.0004427343
    %v148 = vsel %vm147, %v145, %v142
    %v149 = vadd.f32 %v113, 1.0
    %v150 = vlog2.pop %v149
    %v151 = vmul.f32 %v150, 0.6931472
    %v152 = vmul.f32 -0.5, %v113
    %v153 = vadd.f32 %v152, 1.0
    %v154 = vmul.f32 %v153, %v113
    %v155 = vand.u32 2147483647, %v113
    %vm156 = vcmp.lt.f32.partialorder %v155, 0.0004427343
    %v157 = vsel %vm156, %v154, %v151
    %v158 = vadd.f32 %v115, 1.0
    %v159 = vlog2.pop %v158
    %v160 = vmul.f32 %v159, 0.6931472
    %v161 = vmul.f32 -0.5, %v115
    %v162 = vadd.f32 %v161, 1.0
    %v163 = vmul.f32 %v162, %v115
    %v164 = vand.u32 2147483647, %v115
    %vm165 = vcmp.lt.f32.partialorder %v164, 0.0004427343
    %v166 = vsel %vm165, %v163, %v160
    %v167 = vadd.f32 %v117, 1.0
    %v168 = vlog2.pop %v167
    %v169 = vmul.f32 %v168, 0.6931472
    %v170 = vmul.f32 -0.5, %v117
    %v171 = vadd.f32 %v170, 1.0
    %v172 = vmul.f32 %v171, %v117
    %v173 = vand.u32 2147483647, %v117
    %vm174 = vcmp.lt.f32.partialorder %v173, 0.0004427343
    %v175 = vsel %vm174, %v172, %v169
    %v176 = vadd.f32 %v119, 1.0
    %v177 = vlog2.pop %v176
    %v178 = vmul.f32 %v177, 0.6931472
    %v179 = vmul.f32 -0.5, %v119
    %v180 = vadd.f32 %v179, 1.0
    %v181 = vmul.f32 %v180, %v119
    %v182 = vand.u32 2147483647, %v119
    %vm183 = vcmp.lt.f32.partialorder %v182, 0.0004427343
    %v184 = vsel %vm183, %v181, %v178
    %v185 = vadd.f32 %v121, 1.0
    %v186 = vlog2.pop %v185
    %v187 = vmul.f32 %v186, 0.6931472
    %v188 = vmul.f32 -0.5, %v121
    %v189 = vadd.f32 %v188, 1.0
    %v190 = vmul.f32 %v189, %v121
    %v191 = vand.u32 2147483647, %v121
    %vm192 = vcmp.lt.f32.partialorder %v191, 0.0004427343
    %v193 = vsel %vm192, %v190, %v187
    %v194 = vadd.f32 %v82, %v130
    %v195 = vadd.f32 %v83, %v139
    %v196 = vadd.f32 %v84, %v148
    %v197 = vadd.f32 %v85, %v157
    %v198 = vadd.f32 %v86, %v166
    %v199 = vadd.f32 %v87, %v175
    %v200 = vadd.f32 %v88, %v184
    %v201 = vadd.f32 %v89, %v193
    %v202 = vsub.f32 1.0, %v66
    %v203 = vsub.f32 1.0, %v67
    %v204 = vsub.f32 1.0, %v68
    %v205 = vsub.f32 1.0, %v69
    %v206 = vsub.f32 1.0, %v70
    %v207 = vsub.f32 1.0, %v71
    %v208 = vsub.f32 1.0, %v72
    %v209 = vsub.f32 1.0, %v73
    %v210 = vmul.f32 %v202, %v54
    %v211 = vmul.f32 %v203, %v55
    %v212 = vmul.f32 %v204, %v56
    %v213 = vmul.f32 %v205, %v57
    %v214 = vmul.f32 %v206, %v58
    %v215 = vmul.f32 %v207, %v59
    %v216 = vmul.f32 %v208, %v60
    %v217 = vmul.f32 %v209, %v61
    %v218 = vadd.f32 %v194, %v210
    %v219 = vadd.f32 %v195, %v211
    %v220 = vadd.f32 %v196, %v212
    %v221 = vadd.f32 %v197, %v213
    %v222 = vadd.f32 %v198, %v214
    %v223 = vadd.f32 %v199, %v215
    %v224 = vadd.f32 %v200, %v216
    %v225 = vadd.f32 %v201, %v217
    %vm226 = vcmp.eq.f32.partialorder %v66, 1.0
    %vm227 = vcmp.eq.f32.partialorder %v67, 1.0
    %vm228 = vcmp.eq.f32.partialorder %v68, 1.0
    %vm229 = vcmp.eq.f32.partialorder %v69, 1.0
    %vm230 = vcmp.eq.f32.partialorder %v70, 1.0
    %vm231 = vcmp.eq.f32.partialorder %v71, 1.0
    %vm232 = vcmp.eq.f32.partialorder %v72, 1.0
    %vm233 = vcmp.eq.f32.partialorder %v73, 1.0
    %v234 = vsel %vm226, 1, 0
    %v235 = vsel %vm227, 1, 0
    %v236 = vsel %vm228, 1, 0
    %v237 = vsel %vm229, 1, 0
    %v238 = vsel %vm230, 1, 0
    %v239 = vsel %vm231, 1, 0
    %v240 = vsel %vm232, 1, 0
    %v241 = vsel %vm233, 1, 0
    %v242 = vcvt.s32.f32 %v234
    %v243 = vcvt.s32.f32 %v235
    %v244 = vcvt.s32.f32 %v236
    %v245 = vcvt.s32.f32 %v237
    %v246 = vcvt.s32.f32 %v238
    %v247 = vcvt.s32.f32 %v239
    %v248 = vcvt.s32.f32 %v240
    %v249 = vcvt.s32.f32 %v241
    %vm250 = vcmp.eq.f32.partialorder %v66, 0.0
    %vm251 = vcmp.eq.f32.partialorder %v67, 0.0
    %vm252 = vcmp.eq.f32.partialorder %v68, 0.0
    %vm253 = vcmp.eq.f32.partialorder %v69, 0.0
    %vm254 = vcmp.eq.f32.partialorder %v70, 0.0
    %vm255 = vcmp.eq.f32.partialorder %v71, 0.0
    %vm256 = vcmp.eq.f32.partialorder %v72, 0.0
    %vm257 = vcmp.eq.f32.partialorder %v73, 0.0
    %v258 = vsel %vm250, 1, 0
    %v259 = vsel %vm251, 1, 0
    %v260 = vsel %vm252, 1, 0
    %v261 = vsel %vm253, 1, 0
    %v262 = vsel %vm254, 1, 0
    %v263 = vsel %vm255, 1, 0
    %v264 = vsel %vm256, 1, 0
    %v265 = vsel %vm257, 1, 0
    %v266 = vcvt.s32.f32 %v258
    %v267 = vcvt.s32.f32 %v259
    %v268 = vcvt.s32.f32 %v260
    %v269 = vcvt.s32.f32 %v261
    %v270 = vcvt.s32.f32 %v262
    %v271 = vcvt.s32.f32 %v263
    %v272 = vcvt.s32.f32 %v264
    %v273 = vcvt.s32.f32 %v265
    %p274 = scmp.eq.s32.totalorder 0, 0
    // Predicated region
    $region18: #{tpu_custom_call.1} parent=1 // pred_check
      %p275 = pneg %p274
    $region19: #{tpu_custom_call.1} parent=1 // pred_check_branch
      %277 = sbr.rel (%p275) target = $region21
    $region20: #{tpu_custom_call.1} parent=1 // pred_region
      %278 = vst [vmem:[#allocation2] sm:$0xff] 0.0
      %279 = vst [vmem:[#allocation2 + $0x8] sm:$0xff] 0.0
      %280 = vst [vmem:[#allocation2 + $0x10] sm:$0xff] 0.0
      %281 = vst [vmem:[#allocation2 + $0x18] sm:$0xff] 0.0
      %282 = vst [vmem:[#allocation3] sm:$0xff] 0.0
      %283 = vst [vmem:[#allocation3 + $0x8] sm:$0xff] 0.0
      %284 = vst [vmem:[#allocation3 + $0x10] sm:$0xff] 0.0
      %285 = vst [vmem:[#allocation3 + $0x18] sm:$0xff] 0.0
      %286 = vst [vmem:[#allocation4] sm:$0xff] 0.0
      %287 = vst [vmem:[#allocation4 + $0x8] sm:$0xff] 0.0
      %288 = vst [vmem:[#allocation4 + $0x10] sm:$0xff] 0.0
      %289 = vst [vmem:[#allocation4 + $0x18] sm:$0xff] 0.0
    $region21: #{tpu_custom_call.1} parent=1 // pred_fallthru
      _
    %v290 = vld [vmem:[#allocation2] sm:$0xff]
    %v291 = vld [vmem:[#allocation2 + $0x8] sm:$0xff]
    %v292 = vld [vmem:[#allocation2 + $0x10] sm:$0xff]
    %v293 = vld [vmem:[#allocation2 + $0x18] sm:$0xff]
    %v294 = vadd.f32 %v218, %v222
    %v295 = vadd.f32 %v219, %v223
    %v296 = vadd.f32 %v220, %v224
    %v297 = vadd.f32 %v221, %v225
    %v298 = vadd.f32 %v290, %v294
    %v299 = vadd.f32 %v291, %v295
    %v300 = vadd.f32 %v292, %v296
    %v301 = vadd.f32 %v293, %v297
    %302 = vst [vmem:[#allocation2] sm:$0xff] %v298
    %303 = vst [vmem:[#allocation2 + $0x8] sm:$0xff] %v299
    %304 = vst [vmem:[#allocation2 + $0x10] sm:$0xff] %v300
    %305 = vst [vmem:[#allocation2 + $0x18] sm:$0xff] %v301
    %v306 = vld [vmem:[#allocation3] sm:$0xff]
    %v307 = vld [vmem:[#allocation3 + $0x8] sm:$0xff]
    %v308 = vld [vmem:[#allocation3 + $0x10] sm:$0xff]
    %v309 = vld [vmem:[#allocation3 + $0x18] sm:$0xff]
    %v310 = vadd.f32 %v242, %v246
    %v311 = vadd.f32 %v243, %v247
    %v312 = vadd.f32 %v244, %v248
    %v313 = vadd.f32 %v245, %v249
    %v314 = vadd.f32 %v306, %v310
    %v315 = vadd.f32 %v307, %v311
    %v316 = vadd.f32 %v308, %v312
    %v317 = vadd.f32 %v309, %v313
    %318 = vst [vmem:[#allocation3] sm:$0xff] %v314
    %319 = vst [vmem:[#allocation3 + $0x8] sm:$0xff] %v315
    %320 = vst [vmem:[#allocation3 + $0x10] sm:$0xff] %v316
    %321 = vst [vmem:[#allocation3 + $0x18] sm:$0xff] %v317
    %v322 = vld [vmem:[#allocation4] sm:$0xff]
    %v323 = vld [vmem:[#allocation4 + $0x8] sm:$0xff]
    %v324 = vld [vmem:[#allocation4 + $0x10] sm:$0xff]
    %v325 = vld [vmem:[#allocation4 + $0x18] sm:$0xff]
    %v326 = vadd.f32 %v266, %v270
    %v327 = vadd.f32 %v267, %v271
    %v328 = vadd.f32 %v268, %v272
    %v329 = vadd.f32 %v269, %v273
    %v330 = vadd.f32 %v322, %v326
    %v331 = vadd.f32 %v323, %v327
    %v332 = vadd.f32 %v324, %v328
    %v333 = vadd.f32 %v325, %v329
    %334 = vst [vmem:[#allocation4] sm:$0xff] %v330
    %335 = vst [vmem:[#allocation4 + $0x8] sm:$0xff] %v331
    %336 = vst [vmem:[#allocation4 + $0x10] sm:$0xff] %v332
    %337 = vst [vmem:[#allocation4 + $0x18] sm:$0xff] %v333
    // Predicated region
    $region22: #{tpu_custom_call.1} parent=1 // pred_check
      %p338 = pneg %p274
    $region23: #{tpu_custom_call.1} parent=1 // pred_check_branch
      %340 = sbr.rel (%p338) target = $region25
    $region24: #{tpu_custom_call.1} parent=1 // pred_region
      %v341 = vld [vmem:[#allocation2] sm:$0xff]
      %v342 = vld [vmem:[#allocation2 + $0x8] sm:$0xff]
      %v343 = vld [vmem:[#allocation2 + $0x10] sm:$0xff]
      %v344 = vld [vmem:[#allocation2 + $0x18] sm:$0xff]
      %345 = vst [vmem:[#allocation10] sm:$0xff] %v341
      %346 = vst [vmem:[#allocation10 + $0x8] sm:$0xff] %v342
      %347 = vst [vmem:[#allocation10 + $0x10] sm:$0xff] %v343
      %348 = vst [vmem:[#allocation10 + $0x18] sm:$0xff] %v344
      %v349 = vld [vmem:[#allocation3] sm:$0xff]
      %v350 = vld [vmem:[#allocation3 + $0x8] sm:$0xff]
      %v351 = vld [vmem:[#allocation3 + $0x10] sm:$0xff]
      %v352 = vld [vmem:[#allocation3 + $0x18] sm:$0xff]
      %353 = vst [vmem:[#allocation10 + $0x20] sm:$0xff] %v349
      %354 = vst [vmem:[#allocation10 + $0x28] sm:$0xff] %v350
      %355 = vst [vmem:[#allocation10 + $0x30] sm:$0xff] %v351
      %356 = vst [vmem:[#allocation10 + $0x38] sm:$0xff] %v352
      %v357 = vld [vmem:[#allocation4] sm:$0xff]
      %v358 = vld [vmem:[#allocation4 + $0x8] sm:$0xff]
      %v359 = vld [vmem:[#allocation4 + $0x10] sm:$0xff]
      %v360 = vld [vmem:[#allocation4 + $0x18] sm:$0xff]
      %361 = vst [vmem:[#allocation10 + $0x40] sm:$0xff] %v357
      %362 = vst [vmem:[#allocation10 + $0x48] sm:$0xff] %v358
      %363 = vst [vmem:[#allocation10 + $0x50] sm:$0xff] %v359
      %364 = vst [vmem:[#allocation10 + $0x58] sm:$0xff] %v360
    $region25: #{tpu_custom_call.1} parent=1 // pred_fallthru
      _
    // Predicated region
    $region26: #{tpu_custom_call.1} parent=1 // pred_check
      _
    $region27: #{tpu_custom_call.1} parent=1 // pred_check_branch
      %366 = sbr.rel (0) target = $region29
    $region28: #{tpu_custom_call.1} parent=1 // pred_region
      %s368 = ssub.s32 1536, 1536
      %369 = vsyncadd [#allocation7], %s368
      %s371 = sshll.u32 [#allocation10], 4
      %s372 = int_to_ptr.vmem [resolvable:$true] %s371
      %374 = dma.vmem_to_hbm [thread:$0]  %s372, 1536, %s2, [#allocation7]
    $region29: #{tpu_custom_call.1} parent=1 // pred_fallthru
      _
    // Predicated region
    $region30: #{tpu_custom_call.1} parent=1 // pred_check
      _
    $region31: #{tpu_custom_call.1} parent=1 // pred_check_branch
      %376 = sbr.rel (0) target = $region33
    $region32: #{tpu_custom_call.1} parent=1 // pred_region
      %377 = dma.done [#allocation7], 1536
    $region33: #{tpu_custom_call.1} parent=1 // pred_fallthru
      _
    %378 = vsyncpa [#allocation6], 1
    %379 = vsyncpa [#allocation9], 1
    %380 = vsyncpa [#allocation7], 1

</llo_original>
